<compile_context>
chip_gen: v5e
topology: v5e:2x2
jax: 0.10.0
libtpu: 0.0.40
codegen_flags: <defaults>
</compile_context>

<pallas_src>
import functools

import jax
import jax.numpy as jnp
from jax import lax
from jax.experimental import pallas as pl
from jax.experimental.pallas import tpu as pltpu


def _round_up(x, n):
    return (x + n - 1) // n * n


def _vmem_capacity_bytes():
    try:
        return int(pltpu.get_tpu_info().vmem_capacity_bytes)
    except Exception:
        return 64 << 20  # v7x per-TC capacity; safe lower bound for v5e/v6e too


def _masked_gram_kernel(y_ref, x_ref, out_ref, *, num_classes, p_pad, fused):
    # y_ref:   (bm, 1)       int8     -- labels for this tile (-1 on padded rows)
    # x_ref:   (bm, p_pad)   bfloat16 -- feature tile (padded rows/cols are zero)
    # out_ref: (p_pad, k*p_pad) f32   -- slab; out[:, j*p:(j+1)*p] = X^T diag(y==j) X
    mi = pl.program_id(1)                       # m-reduction step within this split

    x_bf = x_ref[...]                           # bf16 straight from HBM
    y = y_ref[...].astype(jnp.int32)            # int8 in memory, compare in 32-bit

    if fused:
        # Fuse all class Grams into ONE wide MXU matmul, N = k*p_pad (multiple of 128).
        cols = [jnp.where(y == j, x_bf, jnp.bfloat16(0)) for j in range(num_classes)]
        a = jnp.concatenate(cols, axis=1)       # (bm, k*p_pad)
        # dim-0/dim-0 contraction lowers to a transposed-LHS MXU matmul (no vxpose
        # of the (bm, p) tile expected; verify via pl.lower_as_mlir if tuning further).
        partial = lax.dot_general(
            x_bf, a, (((0,), (0,)), ((), ())),
            preferred_element_type=jnp.float32)

        @pl.when(mi == 0)
        def _():
            out_ref[...] = partial

        @pl.when(mi > 0)
        def _():
            out_ref[...] += partial
    else:
        # Per-class matmuls (N = p_pad >= 256 already fills the MXU); avoids the
        # (bm, k*p_pad) concat temp and its vst/vld traffic.
        @pl.when(mi == 0)
        def _():
            out_ref[...] = jnp.zeros_like(out_ref)

        for j in range(num_classes):
            xj = jnp.where(y == j, x_bf, jnp.bfloat16(0))
            partial = lax.dot_general(
                x_bf, xj, (((0,), (0,)), ((), ())),
                preferred_element_type=jnp.float32)
            out_ref[:, j * p_pad:(j + 1) * p_pad] += partial


def _masked_gram_slab(x, y, num_classes, block_m=2048, n_split=2):
    """x: (m, p) f32, y: (m,) int -> (p_pad, k*p_pad) f32 slab of class Grams."""
    m, p = x.shape
    assert num_classes < 128, "labels are shipped as int8"

    p_pad = max(_round_up(p, 128), 128)         # lane-align the feature dim
    kp = num_classes * p_pad
    fused = p_pad <= 128                        # wide fused matmul only for p=128

    if p_pad != p:
        x = jnp.pad(x, ((0, 0), (0, p_pad - p)))
    x = x.astype(jnp.bfloat16)                  # cast once; kernel streams bf16

    # --- tile-height selection under a VMEM budget (v7x 64 MiB safe) -----------
    rows_per_split = pl.cdiv(m, n_split)
    bm = min(_round_up(block_m, 16), _round_up(rows_per_split, 16))

    def _vmem_est(bm_):
        return (2 * bm_ * p_pad * 2             # x, double-buffered bf16
                + 2 * bm_ * 128                 # labels, int8 lane-padded to 128
                + 2 * p_pad * kp * 4            # resident f32 output slab (x2 slack)
                + (bm_ * kp * 2 if fused else 0)  # concat temp (fused path)
                + p_pad * kp * 4)               # f32 matmul result

    cap = _vmem_capacity_bytes()
    budget = int(cap * 0.55)
    while bm > 16 and _vmem_est(bm) > budget:
        bm = max(16, _round_up(bm // 2, 16))

    steps = pl.cdiv(rows_per_split, bm)
    m_pad = n_split * steps * bm
    if m_pad != m:
        x = jnp.pad(x, ((0, m_pad - m), (0, 0)))                  # zero rows
        y = jnp.pad(y, (0, m_pad - m), constant_values=-1)        # never match a class
    y_col = y.astype(jnp.int8).reshape(m_pad, 1)

    kernel = functools.partial(_masked_gram_kernel, num_classes=num_classes,
                               p_pad=p_pad, fused=fused)
    cost = pl.CostEstimate(
        flops=2 * m_pad * p_pad * kp,
        transcendentals=0,
        bytes_accessed=2 * m_pad * p_pad + m_pad + 4 * n_split * p_pad * kp)
    vmem_limit = min(int(cap * 0.85), max(_vmem_est(bm) + (8 << 20), 32 << 20))

    # TODO(synk): for large num_classes in the compute-bound regime a class-sorted
    # grouped-matmul (scalar-prefetch group offsets) would avoid the ~k x masked
    # zero-FLOPs; below the roofline ridge the zeros are free so masking is kept.
    slab = pl.pallas_call(
        kernel,
        out_shape=jax.ShapeDtypeStruct((n_split, p_pad, kp), jnp.float32),
        grid_spec=pltpu.PrefetchScalarGridSpec(
            num_scalar_prefetch=0,
            grid=(n_split, steps),
            in_specs=[
                pl.BlockSpec((bm, 1), lambda c, mi: (c * steps + mi, 0)),
                pl.BlockSpec((bm, p_pad), lambda c, mi: (c * steps + mi, 0)),
            ],
            out_specs=pl.BlockSpec((None, p_pad, kp), lambda c, mi: (c, 0, 0)),
        ),
        compiler_params=pltpu.CompilerParams(
            # leading split axis feeds both TensorCores on v7x; m-tiles are a reduction
            dimension_semantics=("parallel", "arbitrary"),
            vmem_limit_bytes=vmem_limit),
        cost_estimate=cost,
    )(y_col, x)

    return jnp.sum(slab, axis=0)                # (p_pad, k*p_pad)


def masked_grams(x, y, num_classes, block_m=2048):
    """Returns (G_cls: (k,p,p), G_full: (p,p)) with G_cls[j] = X^T diag(y==j) X."""
    m, p = x.shape
    slab = _masked_gram_slab(x, y, num_classes, block_m)          # (p_pad, k*p_pad)
    p_pad = slab.shape[0]
    g_cls = slab.reshape(p_pad, num_classes, p_pad).transpose(1, 0, 2)[:, :p, :p]
    g_full = jnp.sum(g_cls, axis=0)             # exact: masks disjoint + exhaustive
    return g_cls, g_full


def mcr2_forward(X, Y, num_classes, gam1=1.0, gam2=1.0, eps=0.01):
    """Matches MaximalCodingRateReduction.forward semantics.

    X: (m, p) float32 features, Y: (m,) int labels in [0, num_classes).
    Returns (total_loss_empi, [d_empi, c_empi], [d_theo, c_theo]).
    """
    X = X.astype(jnp.float32)
    m, p = X.shape

    G_cls, G_full = masked_grams(X, Y, num_classes)               # (k,p,p), (p,p)

    counts = jnp.sum(Y[None, :] == jnp.arange(num_classes)[:, None],
                     axis=1).astype(jnp.float32)
    trPi = counts + 1e-8                                          # trace(Pi[j]) + 1e-8

    I = jnp.eye(p, dtype=jnp.float32)
    scalar_full = p / (m * eps)
    scalars_cls = p / (trPi * eps)                                # (k,)

    # Stack all logdet arguments: k class matrices + empirical full + theoretical full.
    mats = jnp.concatenate([
        I[None, :, :] + scalars_cls[:, None, None] * G_cls,
        (I + gam1 * scalar_full * G_full)[None],
        (I + scalar_full * G_full)[None],
    ], axis=0)
    mats = 0.5 * (mats + jnp.swapaxes(mats, -1, -2))              # enforce exact symmetry

    # TODO(synk): torch.logdet (matrix factorization) has no clean Pallas TPU primitive;
    # batched Cholesky logdet (valid since I + s*G is SPD) is computed in plain JAX.
    L = jnp.linalg.cholesky(mats)
    lds = 2.0 * jnp.sum(jnp.log(jnp.diagonal(L, axis1=-2, axis2=-1)), axis=-1)

    lds_cls = lds[:num_classes]
    discrimn_empi = lds[num_classes] / 2.0
    discrimn_theo = lds[num_classes + 1] / 2.0
    compress_empi = jnp.sum(lds_cls * trPi / m) / 2.0
    compress_theo = jnp.sum(trPi / (2.0 * m) * lds_cls)

    total_loss_empi = -discrimn_empi * gam2 + gam1 * compress_empi
    return (total_loss_empi,
            [discrimn_empi, compress_empi],
            [discrimn_theo, compress_theo])


if __name__ == "__main__":
    key = jax.random.PRNGKey(0)
    kx, ky = jax.random.split(key)

    m, p, num_classes = 32, 128, 4
    X = jax.random.normal(kx, (m, p), dtype=jnp.float32)
    Y = jax.random.randint(ky, (m,), 0, num_classes)

    total, empi, theo = mcr2_forward(X, Y, num_classes, gam1=1.0, gam2=1.0, eps=0.01)
    jax.block_until_ready(total)

    # Sanity check: kernel Gram matrices vs a pure-JAX reference using the same
    # bf16 quantization of the operands (kernel accumulates in f32 on the MXU).
    G_cls, G_full = masked_grams(X, Y, num_classes)
    x_bf = X.astype(jnp.bfloat16).astype(jnp.float32)
    onehot = (Y[None, :] == jnp.arange(num_classes)[:, None]).astype(jnp.float32)  # (k, m)
    ref_cls = jnp.einsum('km,mp,mq->kpq', onehot, x_bf, x_bf,
                         precision=jax.lax.Precision.HIGHEST)
    ref_full = jnp.einsum('mp,mq->pq', x_bf, x_bf,
                          precision=jax.lax.Precision.HIGHEST)
    assert jnp.allclose(G_cls, ref_cls, atol=1e-2, rtol=1e-3)
    assert jnp.allclose(G_full, ref_full, atol=1e-2, rtol=1e-3)
    assert bool(jnp.isfinite(total))

    print("KERNEL_OK")
</pallas_src>

<mosaic_0001>
module attributes {stable_mosaic.version = 11 : i64} {
  func.func @_masked_gram_kernel(%arg0: i32, %arg1: i32, %arg2: memref<16x1xi8, #tpu.memory_space<vmem>>, %arg3: memref<16x128xbf16, #tpu.memory_space<vmem>>, %arg4: memref<1x128x512xf32, #tpu.memory_space<vmem>>) attributes {dimension_semantics = [#tpu.dimension_semantics<parallel>, #tpu.dimension_semantics<arbitrary>], iteration_bounds = array<i64: 2, 1>, scalar_prefetch = 0 : i64, scratch_operands = 0 : i64, tpu.core_type = #tpu.core_type<tc>, window_params = [{transform_indices = @transform_0, window_bounds = array<i64: 16, 1>}, {transform_indices = @transform_1, window_bounds = array<i64: 16, 128>}, {transform_indices = @transform_2, window_bounds = array<i64: 1, 128, 512>}]} {
    %c0 = arith.constant 0 : index
    %c0_0 = arith.constant 0 : index
    %0 = vector.load %arg3[%c0, %c0_0] : memref<16x128xbf16, #tpu.memory_space<vmem>>, vector<16x128xbf16>
    %c0_1 = arith.constant 0 : index
    %c0_2 = arith.constant 0 : index
    %1 = vector.load %arg2[%c0_1, %c0_2] : memref<16x1xi8, #tpu.memory_space<vmem>>, vector<16x1xi8>
    %2 = arith.extsi %1 : vector<16x1xi8> to vector<16x1xi32>
    %c0_i32 = arith.constant 0 : i32
    %3 = vector.broadcast %c0_i32 : i32 to vector<16x1xi32>
    %4 = arith.cmpi eq, %2, %3 : vector<16x1xi32>
    %cst = arith.constant 0.000000e+00 : bf16
    %5 = vector.shape_cast %4 : vector<16x1xi1> to vector<16x1xi1>
    %6 = vector.broadcast %5 : vector<16x1xi1> to vector<16x128xi1>
    %7 = vector.broadcast %cst : bf16 to vector<16x128xbf16>
    %8 = arith.select %6, %0, %7 : vector<16x128xi1>, vector<16x128xbf16>
    %c1_i32 = arith.constant 1 : i32
    %9 = vector.broadcast %c1_i32 : i32 to vector<16x1xi32>
    %10 = arith.cmpi eq, %2, %9 : vector<16x1xi32>
    %cst_3 = arith.constant 0.000000e+00 : bf16
    %11 = vector.shape_cast %10 : vector<16x1xi1> to vector<16x1xi1>
    %12 = vector.broadcast %11 : vector<16x1xi1> to vector<16x128xi1>
    %13 = vector.broadcast %cst_3 : bf16 to vector<16x128xbf16>
    %14 = arith.select %12, %0, %13 : vector<16x128xi1>, vector<16x128xbf16>
    %c2_i32 = arith.constant 2 : i32
    %15 = vector.broadcast %c2_i32 : i32 to vector<16x1xi32>
    %16 = arith.cmpi eq, %2, %15 : vector<16x1xi32>
    %cst_4 = arith.constant 0.000000e+00 : bf16
    %17 = vector.shape_cast %16 : vector<16x1xi1> to vector<16x1xi1>
    %18 = vector.broadcast %17 : vector<16x1xi1> to vector<16x128xi1>
    %19 = vector.broadcast %cst_4 : bf16 to vector<16x128xbf16>
    %20 = arith.select %18, %0, %19 : vector<16x128xi1>, vector<16x128xbf16>
    %c3_i32 = arith.constant 3 : i32
    %21 = vector.broadcast %c3_i32 : i32 to vector<16x1xi32>
    %22 = arith.cmpi eq, %2, %21 : vector<16x1xi32>
    %cst_5 = arith.constant 0.000000e+00 : bf16
    %23 = vector.shape_cast %22 : vector<16x1xi1> to vector<16x1xi1>
    %24 = vector.broadcast %23 : vector<16x1xi1> to vector<16x128xi1>
    %25 = vector.broadcast %cst_5 : bf16 to vector<16x128xbf16>
    %26 = arith.select %24, %0, %25 : vector<16x128xi1>, vector<16x128xbf16>
    %27 = tpu.concatenate %8, %14, %20, %26 in 1 : vector<16x128xbf16>, vector<16x128xbf16>, vector<16x128xbf16>, vector<16x128xbf16> -> vector<16x512xbf16>
    %cst_6 = arith.constant dense<0.000000e+00> : vector<128x512xf32>
    %28 = tpu.matmul %0, %27, %cst_6 {dimension_numbers = #tpu.dot_dimension_numbers<[0], [0], [1], [1], [0, 1, 1, 1], [], []>} : vector<16x128xbf16>, vector<16x512xbf16>, vector<128x512xf32> -> vector<128x512xf32>
    %c0_i32_7 = arith.constant 0 : i32
    %29 = arith.cmpi eq, %arg1, %c0_i32_7 : i32
    %30 = arith.extui %29 : i1 to i32
    %c0_i32_8 = arith.constant 0 : i32
    %31 = arith.cmpi ne, %30, %c0_i32_8 : i32
    scf.if %31 {
      %c0_11 = arith.constant 0 : index
      %c0_12 = arith.constant 0 : index
      %c0_13 = arith.constant 0 : index
      %35 = vector.load %arg4[%c0_11, %c0_12, %c0_13] : memref<1x128x512xf32, #tpu.memory_space<vmem>>, vector<1x128x512xf32>
      %36 = vector.shape_cast %35 : vector<1x128x512xf32> to vector<128x512xf32>
      %37 = vector.shape_cast %28 : vector<128x512xf32> to vector<1x128x512xf32>
      tpu.vector_store %arg4[%c0_11, %c0_12, %c0_13], %37 {strides = array<i32>} : memref<1x128x512xf32, #tpu.memory_space<vmem>>, vector<1x128x512xf32>,
    } else {
    }
    %c0_i32_9 = arith.constant 0 : i32
    %32 = arith.cmpi sgt, %arg1, %c0_i32_9 : i32
    %33 = arith.extui %32 : i1 to i32
    %c0_i32_10 = arith.constant 0 : i32
    %34 = arith.cmpi ne, %33, %c0_i32_10 : i32
    scf.if %34 {
      %c0_11 = arith.constant 0 : index
      %c0_12 = arith.constant 0 : index
      %c0_13 = arith.constant 0 : index
      %35 = vector.load %arg4[%c0_11, %c0_12, %c0_13] : memref<1x128x512xf32, #tpu.memory_space<vmem>>, vector<1x128x512xf32>
      %36 = vector.shape_cast %35 : vector<1x128x512xf32> to vector<128x512xf32>
      %37 = arith.addf %36, %28 : vector<128x512xf32>
      %c0_14 = arith.constant 0 : index
      %c0_15 = arith.constant 0 : index
      %c0_16 = arith.constant 0 : index
      %38 = vector.load %arg4[%c0_14, %c0_15, %c0_16] : memref<1x128x512xf32, #tpu.memory_space<vmem>>, vector<1x128x512xf32>
      %39 = vector.shape_cast %38 : vector<1x128x512xf32> to vector<128x512xf32>
      %40 = vector.shape_cast %37 : vector<128x512xf32> to vector<1x128x512xf32>
      tpu.vector_store %arg4[%c0_14, %c0_15, %c0_16], %40 {strides = array<i32>} : memref<1x128x512xf32, #tpu.memory_space<vmem>>, vector<1x128x512xf32>,
    } else {
    }
    return
  }
  func.func @transform_0(%arg0: i32, %arg1: i32) -> (i32, i32) {
    %c1_i32 = arith.constant 1 : i32
    %0 = arith.muli %arg0, %c1_i32 : i32
    %1 = arith.addi %0, %arg1 : i32
    %c0_i32 = arith.constant 0 : i32
    %c0_i32_0 = arith.constant 0 : i32
    return %1, %c0_i32 : i32, i32
  }
  func.func @transform_1(%arg0: i32, %arg1: i32) -> (i32, i32) {
    %c1_i32 = arith.constant 1 : i32
    %0 = arith.muli %arg0, %c1_i32 : i32
    %1 = arith.addi %0, %arg1 : i32
    %c0_i32 = arith.constant 0 : i32
    %c0_i32_0 = arith.constant 0 : i32
    return %1, %c0_i32 : i32, i32
  }
  func.func @transform_2(%arg0: i32, %arg1: i32) -> (i32, i32, i32) {
    %c0_i32 = arith.constant 0 : i32
    %c0_i32_0 = arith.constant 0 : i32
    %c0_i32_1 = arith.constant 0 : i32
    return %arg0, %c0_i32, %c0_i32_0 : i32, i32, i32
  }
}

</mosaic_0001>

<llo_original>
// kernel: tpu_custom_call.1
$region0: #{tpu_custom_call.1}
  #allocation0 [shape = 'u32[]', space=smem, size = 0x4, offset = 0x4, fixed_abs, tag = 'smem constant byte address 0x4 - core index']
  #allocation1 [shape = 'u32[72,128]{1,0:T(1,128)}', space=vmem, size = 0x9000, scoped, tag = 'internal scratch']
  %s0 = inlined_call_operand.vmem [shape: s8[32,1], index: 0, kind: input, shape index: {}]
  %s1 = inlined_call_operand.hbm [shape: bf16[32,128], index: 1, kind: input, shape index: {}]
  %s2 = inlined_call_operand.hbm [shape: f32[2,128,512], index: 2, kind: output, shape index: {}]
  %s3 = sld [smem:[#allocation0]]
  $region53: #{tpu_custom_call.1} parent=0
    _
  %s5 = ssub.s32 1, %s3
  %s6 = scalar_select 0, %s5, %s3
  $region1: #{tpu_custom_call.1} parent=0
    #allocation2 [shape = 'u8[8192]{0}', space=vmem, size = 0x2000, scoped, tag = 'input window, operand 1']
    #allocation3 [shape = 's32[2]{0}', space=sflag, size = 0x8, scoped, tag = 'scoped memory for tpu_custom_call.1']
    #allocation4 [shape = 's32[2]{0}', space=sflag, size = 0x8, scoped, tag = 'scoped memory for tpu_custom_call.1']
    #allocation5 [shape = 'u8[524288]{0}', space=vmem, size = 0x80000, scoped, tag = 'output window, operand 0']
    %7 = vsyncpa [#allocation3], 0
    %s8 = scalar_lea.sflag [#allocation3], 1
    %9 = vsyncpa %s8, 0
    %10 = vsyncpa [#allocation4], 0
    %s11 = scalar_lea.sflag [#allocation4], 1
    %12 = vsyncpa %s11, 0
    loop: start=0, step=1, limit=4
    $region2: #{tpu_custom_call.1} parent=1 // loop_pre_header
      _
    $region3: #{tpu_custom_call.1} parent=1 // loop_header
      %s14 = sphi 0, %s18
      %p15 = scmp.ge.s32.totalorder %s14, 4
      %s21 = sphi 0, %s33
      %s22 = sphi 0, %s29
      %s23 = sphi 0, %s21
      %s24 = sphi 0, %s22
      %s25 = sphi 0, %s23
      %s26 = sphi 0, %s24
      %s38 = sphi 0, %s40
      %s41 = sphi 0, %s38
      %s42 = sphi 0, %s41
      %s58 = sphi 0, %s42
      %s66 = sphi 0, %s68
      %s69 = sphi 0, %s66
      %s70 = sphi 0, %s69
      %s86 = sphi 0, %s70
      %s92 = sphi 0, %s94
      %s95 = sphi 0, %s92
      %s96 = sphi 0, %s95
      %s112 = sphi 0, %s96
    $region4: #{tpu_custom_call.1} parent=1 // loop_header_branch
      %17 = sbr.rel (%p15) target = $region8
    $region5: #{tpu_custom_call.1} parent=1 // loop_body
      %s19 = ssub.s32 %s14, 1
      %s20 = ssub.s32 %s14, 2
      %s27 = sadd.s32 1, %s22
      %p28 = scmp.ge.s32.totalorder %s27, 1
      %s29 = scalar_select %p28, 0, %s27
      %s30 = sadd.s32 1, %s21
      %s31 = scalar_select %p28, %s30, %s21
      %p32 = scmp.ge.s32.totalorder %s31, 2
      %s33 = scalar_select %p32, 0, %s31
      %s34 = sadd.s32 %s21, %s22
      %s35 = sadd.s32 %s33, %s29
      %s36 = ssub.s32 %s34, %s35
      %p37 = scmp.eq.s32.totalorder %s36, 0
      %s39 = sadd.s32 %s38, 1
      %s40 = scalar_select %p37, %s38, %s39
      %p43 = pneg %p37
      %p44 = scmp.eq.s32.totalorder %s14, 1
      %p45 = por %p43, %p44
      %p46 = scmp.ne.s32.totalorder %s38, %s41
      %p47 = scmp.eq.s32.totalorder %s14, 0
      %p48 = por %p46, %p47
      %p49 = scmp.ne.s32.totalorder %s38, %s41
      %p50 = scmp.eq.s32.totalorder %s19, 1
      %p51 = por %p49, %p50
      %p52 = scmp.ne.s32.totalorder %s41, %s42
      %p53 = scmp.eq.s32.totalorder %s19, 0
      %p54 = por %p52, %p53
      %p55 = scmp.ne.s32.totalorder %s41, %s42
      %p56 = scmp.eq.s32.totalorder %s20, 1
      %p57 = por %p55, %p56
      %p59 = scmp.ne.s32.totalorder %s42, %s58
      %p60 = scmp.eq.s32.totalorder %s20, 0
      %p61 = por %p59, %p60
      %s62 = sadd.s32 %s21, %s22
      %s63 = sadd.s32 %s33, %s29
      %s64 = ssub.s32 %s62, %s63
      %p65 = scmp.eq.s32.totalorder %s64, 0
      %s67 = sadd.s32 %s66, 1
      %s68 = scalar_select %p65, %s66, %s67
      %p71 = pneg %p65
      %p72 = scmp.eq.s32.totalorder %s14, 1
      %p73 = por %p71, %p72
      %p74 = scmp.ne.s32.totalorder %s66, %s69
      %p75 = scmp.eq.s32.totalorder %s14, 0
      %p76 = por %p74, %p75
      %p77 = scmp.ne.s32.totalorder %s66, %s69
      %p78 = scmp.eq.s32.totalorder %s19, 1
      %p79 = por %p77, %p78
      %p80 = scmp.ne.s32.totalorder %s69, %s70
      %p81 = scmp.eq.s32.totalorder %s19, 0
      %p82 = por %p80, %p81
      %p83 = scmp.ne.s32.totalorder %s69, %s70
      %p84 = scmp.eq.s32.totalorder %s20, 1
      %p85 = por %p83, %p84
      %p87 = scmp.ne.s32.totalorder %s70, %s86
      %p88 = scmp.eq.s32.totalorder %s20, 0
      %p89 = por %p87, %p88
      %s90 = ssub.s32 %s21, %s33
      %p91 = scmp.eq.s32.totalorder %s90, 0
      %s93 = sadd.s32 %s92, 1
      %s94 = scalar_select %p91, %s92, %s93
      %p97 = pneg %p91
      %p98 = scmp.eq.s32.totalorder %s14, 1
      %p99 = por %p97, %p98
      %p100 = scmp.ne.s32.totalorder %s92, %s95
      %p101 = scmp.eq.s32.totalorder %s14, 0
      %p102 = por %p100, %p101
      %p103 = scmp.ne.s32.totalorder %s92, %s95
      %p104 = scmp.eq.s32.totalorder %s19, 1
      %p105 = por %p103, %p104
      %p106 = scmp.ne.s32.totalorder %s95, %s96
      %p107 = scmp.eq.s32.totalorder %s19, 0
      %p108 = por %p106, %p107
      %p109 = scmp.ne.s32.totalorder %s95, %s96
      %p110 = scmp.eq.s32.totalorder %s20, 1
      %p111 = por %p109, %p110
      %p113 = scmp.ne.s32.totalorder %s96, %s112
      %p114 = scmp.eq.s32.totalorder %s20, 0
      %p115 = por %p113, %p114
      %p116 = scmp.le.s32.totalorder 1, %s14
      %p117 = scmp.lt.s32.totalorder %s14, 3
      %p118 = pnand %p116, %p117
      %p119 = pneg %p118
      // Predicated region
      $region9: #{tpu_custom_call.1} parent=5 // pred_check
        _
      $region10: #{tpu_custom_call.1} parent=5 // pred_check_branch
        %121 = sbr.rel (%p118) target = $region12
      $region11: #{tpu_custom_call.1} parent=5 // pred_region
        %s122 = ssub.s32 %s14, 1
      $region12: #{tpu_custom_call.1} parent=5 // pred_fallthru
        _
      %p123 = scmp.lt.s32.totalorder %s14, 2
      // Predicated region
      $region13: #{tpu_custom_call.1} parent=5 // pred_check
        %p124 = pneg %p123
      $region14: #{tpu_custom_call.1} parent=5 // pred_check_branch
        %126 = sbr.rel (%p124) target = $region16
      $region15: #{tpu_custom_call.1} parent=5 // pred_region
        // Predicated region
        $region17: #{tpu_custom_call.1} parent=15 // pred_check
          %p127 = pneg %p48
        $region18: #{tpu_custom_call.1} parent=15 // pred_check_branch
          %129 = sbr.rel (%p127) target = $region20
        $region19: #{tpu_custom_call.1} parent=15 // pred_region
          %s130 = sadd.s32 %s21, %s22
          %s131 = smul.u32 2, %s130
          %p132 = scmp.lt.s32.totalorder %s131, 3
          %s133 = scalar_select %p132, %s131, 3
          %s134 = smul.addr %s133, 2
          %s135 = scalar_lea.vmem %s0, %s134
          %s136 = sadd.s32 %s21, %s22
          %s137 = smul.u32 2, %s136
        $region20: #{tpu_custom_call.1} parent=15 // pred_fallthru
          _
        // Predicated region
        $region21: #{tpu_custom_call.1} parent=15 // pred_check
          %p138 = pneg %p76
        $region22: #{tpu_custom_call.1} parent=15 // pred_check_branch
          %140 = sbr.rel (%p138) target = $region24
        $region23: #{tpu_custom_call.1} parent=15 // pred_region
          %s141 = sand.u32 %s66, 1
          %s142 = scalar_lea.sflag [#allocation3], %s141
          %s143 = sand.u32 %s66, 1
          %s144 = smul.addr %s143, 8
          %s145 = scalar_lea.vmem [#allocation2], %s144
          %s146 = sadd.s32 %s21, %s22
          %s147 = smul.u32 2, %s146
          %149 = vsyncadd %s142, 0
          %s150 = smul.addr %s147, 4
          %s151 = scalar_lea.hbm %s1, %s150
          %s152 = sshll.u32 %s151, 4
          %s153 = int_to_ptr.hbm [resolvable:$true] %s152
          %s154 = sshll.u32 %s145, 4
          %s155 = int_to_ptr.vmem [resolvable:$true] %s154
          %160 = dma.hbm_to_vmem [thread:$0]  %s153, 128, %s155, %s142, 64, 64, 4
        $region24: #{tpu_custom_call.1} parent=15 // pred_fallthru
          _
      $region16: #{tpu_custom_call.1} parent=5 // pred_fallthru
        _
      %p161 = scmp.le.s32.totalorder 1, %s14
      %p162 = scmp.lt.s32.totalorder %s14, 3
      %p163 = pnand %p161, %p162
      %p164 = pneg %p163
      // Predicated region
      $region25: #{tpu_custom_call.1} parent=5 // pred_check
        _
      $region26: #{tpu_custom_call.1} parent=5 // pred_check_branch
        %166 = sbr.rel (%p163) target = $region28
      $region27: #{tpu_custom_call.1} parent=5 // pred_region
        %s167 = ssub.s32 %s14, 1
        %s168 = sand.u32 %s69, 1
        %s169 = scalar_lea.sflag [#allocation3], %s168
        %s170 = sand.u32 %s69, 1
        %s171 = smul.addr %s170, 8
        %s172 = scalar_lea.vmem [#allocation2], %s171
        // Predicated region
        $region29: #{tpu_custom_call.1} parent=27 // pred_check
          %p173 = pneg %p82
        $region30: #{tpu_custom_call.1} parent=27 // pred_check_branch
          %175 = sbr.rel (%p173) target = $region32
        $region31: #{tpu_custom_call.1} parent=27 // pred_region
          %177 = dma.done %s169, 128
        $region32: #{tpu_custom_call.1} parent=27 // pred_fallthru
          _
        %s178 = sadd.s32 %s23, %s24
        %s179 = smul.u32 2, %s178
        %p180 = scmp.lt.s32.totalorder %s179, 3
        %s181 = scalar_select %p180, %s179, 3
        %s182 = smul.addr %s181, 2
        %s183 = scalar_lea.vmem %s0, %s182
        %p184 = pneg %p54
        %p185 = pneg %p51
        %s186 = sand.u32 %s69, 1
        %s187 = scalar_lea.sflag [#allocation3], %s186
        %s188 = sand.u32 %s69, 1
        %s189 = smul.addr %s188, 8
        %s190 = scalar_lea.vmem [#allocation2], %s189
        %p191 = pneg %p82
        %p192 = pneg %p79
        %p193 = pneg %p108
        %p194 = pneg %p105
        %s195 = sand.u32 %s95, 1
        %s196 = scalar_lea.sflag [#allocation4], %s195
        %s197 = sand.u32 %s95, 1
        %s198 = smul.addr %s197, 512
        %s199 = scalar_lea.vmem [#allocation5], %s198
        %s200 = sadd.s32 %s23, %s24
        %s201 = smul.u32 2, %s200
        %p202 = scmp.lt.s32.totalorder %s201, 3
        %s203 = scalar_select %p202, %s201, 3
        %s204 = smul.addr %s203, 2
        %s205 = scalar_lea.vmem %s0, %s204
        %s206 = sadd.s32 %s23, %s24
        %s207 = smul.u32 2, %s206
        %s208 = sadd.s32 %s23, %s24
        %s209 = smul.u32 2, %s208
        %v211 = vld [vmem:[%s172] sm:$0xf]
        %v212 = vld [vmem:[%s172 + $0x4] sm:$0xf]
        %v213 = vld [vmem:[%s205] sm:$0x3]
        %v214 = vld [vmem:[%s205 + $0x2] sm:$0x3]
        %v215 = vunpack.c.0.s8 %v213
        %v216 = vunpack.c.0.s8 %v214
        %vm217 = vcmp.eq.s32.totalorder %v215, 0
        %vm218 = vcmp.eq.s32.totalorder %v216, 0
        %v219 = vsel %vm217, 1, 0
        %v220 = vsel %vm218, 1, 0
        %221 = vset.pattern.permute.xlu0 0
        %222 = vperm.xlu0 %221, %v219
        %v223 = vpop.permute.xlu0 %222
        %224 = vset.pattern.permute.xlu0 0
        %225 = vperm.xlu0 %224, %v220
        %v226 = vpop.permute.xlu0 %225
        %vm227 = vcmp.eq.s32.totalorder %v223, 1
        %vm228 = vcmp.eq.s32.totalorder %v226, 1
        %vm229 = vmpackc.low %vm227, %vm227
        %vm230 = vmpackc.low %vm228, %vm228
        %v231 = vsel %vm229, %v211, 0
        %v232 = vsel %vm230, %v212, 0
        %vm233 = vcmp.eq.s32.totalorder %v215, 1
        %vm234 = vcmp.eq.s32.totalorder %v216, 1
        %v235 = vsel %vm233, 1, 0
        %v236 = vsel %vm234, 1, 0
        %237 = vset.pattern.permute.xlu0 0
        %238 = vperm.xlu0 %237, %v235
        %v239 = vpop.permute.xlu0 %238
        %240 = vset.pattern.permute.xlu0 0
        %241 = vperm.xlu0 %240, %v236
        %v242 = vpop.permute.xlu0 %241
        %vm243 = vcmp.eq.s32.totalorder %v239, 1
        %vm244 = vcmp.eq.s32.totalorder %v242, 1
        %vm245 = vmpackc.low %vm243, %vm243
        %vm246 = vmpackc.low %vm244, %vm244
        %v247 = vsel %vm245, %v211, 0
        %v248 = vsel %vm246, %v212, 0
        %vm249 = vcmp.eq.s32.totalorder %v215, 2
        %vm250 = vcmp.eq.s32.totalorder %v216, 2
        %v251 = vsel %vm249, 1, 0
        %v252 = vsel %vm250, 1, 0
        %253 = vset.pattern.permute.xlu0 0
        %254 = vperm.xlu0 %253, %v251
        %v255 = vpop.permute.xlu0 %254
        %256 = vset.pattern.permute.xlu0 0
        %257 = vperm.xlu0 %256, %v252
        %v258 = vpop.permute.xlu0 %257
        %vm259 = vcmp.eq.s32.totalorder %v255, 1
        %vm260 = vcmp.eq.s32.totalorder %v258, 1
        %vm261 = vmpackc.low %vm259, %vm259
        %vm262 = vmpackc.low %vm260, %vm260
        %v263 = vsel %vm261, %v211, 0
        %v264 = vsel %vm262, %v212, 0
        %vm265 = vcmp.eq.s32.totalorder %v215, 3
        %vm266 = vcmp.eq.s32.totalorder %v216, 3
        %v267 = vsel %vm265, 1, 0
        %v268 = vsel %vm266, 1, 0
        %269 = vset.pattern.permute.xlu0 0
        %270 = vperm.xlu0 %269, %v267
        %v271 = vpop.permute.xlu0 %270
        %272 = vset.pattern.permute.xlu0 0
        %273 = vperm.xlu0 %272, %v268
        %v274 = vpop.permute.xlu0 %273
        %vm275 = vcmp.eq.s32.totalorder %v271, 1
        %vm276 = vcmp.eq.s32.totalorder %v274, 1
        %vm277 = vmpackc.low %vm275, %vm275
        %vm278 = vmpackc.low %vm276, %vm276
        %v279 = vsel %vm277, %v211, 0
        %v280 = vsel %vm278, %v212, 0
        %v283 = vunpack.c.l.b16 %v231
        %v284 = vunpack.c.l.b16 %v232
        %v285 = vpack.c.b16 %v284, %v283
        %v289 = vunpack.c.l.b16 %v247
        %v290 = vunpack.c.l.b16 %v248
        %v291 = vpack.c.b16 %v290, %v289
        %v295 = vunpack.c.l.b16 %v263
        %v296 = vunpack.c.l.b16 %v264
        %v297 = vpack.c.b16 %v296, %v295
        %v301 = vunpack.c.l.b16 %v279
        %v302 = vunpack.c.l.b16 %v280
        %v303 = vpack.c.b16 %v302, %v301
        %v307 = vunpack.c.l.b16 %v211
        %v308 = vunpack.c.l.b16 %v212
        %v309 = vpack.c.b16 %v308, %v307
        %311 = vxpose.xlu0.c.b16.start [1/8] %v309, 128
        %312 = vxpose.xlu0.c.b16.cont [2/8] 0, 128
        %313 = vxpose.xlu0.c.b16.cont [3/8] 0, 128
        %314 = vxpose.xlu0.c.b16.cont [4/8] 0, 128
        %315 = vxpose.xlu0.c.b16.cont [5/8] 0, 128
        %316 = vxpose.xlu0.c.b16.cont [6/8] 0, 128
        %317 = vxpose.xlu0.c.b16.cont [7/8] 0, 128
        %318 = vxpose.xlu0.c.b16.end [8/8] 0, 128
        %v319 = vpop.trf.xlu0
        %v320 = vpop.trf.xlu0
        %v321 = vpop.trf.xlu0
        %v322 = vpop.trf.xlu0
        %v323 = vpop.trf.xlu0
        %v324 = vpop.trf.xlu0
        %v325 = vpop.trf.xlu0
        %v326 = vpop.trf.xlu0
        %vm327 = vcmask 130048
        %v329 = vsel %vm327, %v319, 0
        %v332 = vsel %vm327, %v320, 0
        %v335 = vsel %vm327, %v321, 0
        %v338 = vsel %vm327, %v322, 0
        %v341 = vsel %vm327, %v323, 0
        %v344 = vsel %vm327, %v324, 0
        %v347 = vsel %vm327, %v325, 0
        %v350 = vsel %vm327, %v326, 0
        %352 = vmatpush.bf16.msra.mxu0 0
        %353 = vmatpush.bf16.msra.mxu0 0
        %354 = vmatpush.bf16.msra.mxu0 0
        %355 = vmatpush.bf16.msra.mxu0 0
        %356 = vmatpush.bf16.msra.mxu0 0
        %357 = vmatpush.bf16.msra.mxu0 0
        %358 = vmatpush.bf16.msra.mxu0 0
        %359 = vmatpush.bf16.msra.mxu0 %v285
        %360 = vmatmul.bf16.gmra.mxu0 %v329
        %v361 = vpop.f32.mrf.mxu0
        %v362 = vadd.f32 0.0, %v361
        %v363 = vpop.f32.mrf.mxu0
        %v364 = vadd.f32 0.0, %v363
        %365 = vmatmul.bf16.gmra.mxu0 %v332
        %v366 = vpop.f32.mrf.mxu0
        %v367 = vadd.f32 0.0, %v366
        %v368 = vpop.f32.mrf.mxu0
        %v369 = vadd.f32 0.0, %v368
        %370 = vmatmul.bf16.gmra.mxu0 %v335
        %v371 = vpop.f32.mrf.mxu0
        %v372 = vadd.f32 0.0, %v371
        %v373 = vpop.f32.mrf.mxu0
        %v374 = vadd.f32 0.0, %v373
        %375 = vmatmul.bf16.gmra.mxu0 %v338
        %v376 = vpop.f32.mrf.mxu0
        %v377 = vadd.f32 0.0, %v376
        %v378 = vpop.f32.mrf.mxu0
        %v379 = vadd.f32 0.0, %v378
        %380 = vmatmul.bf16.gmra.mxu0 %v341
        %v381 = vpop.f32.mrf.mxu0
        %v382 = vadd.f32 0.0, %v381
        %v383 = vpop.f32.mrf.mxu0
        %v384 = vadd.f32 0.0, %v383
        %385 = vmatmul.bf16.gmra.mxu0 %v344
        %v386 = vpop.f32.mrf.mxu0
        %v387 = vadd.f32 0.0, %v386
        %v388 = vpop.f32.mrf.mxu0
        %v389 = vadd.f32 0.0, %v388
        %390 = vmatmul.bf16.gmra.mxu0 %v347
        %v391 = vpop.f32.mrf.mxu0
        %v392 = vadd.f32 0.0, %v391
        %v393 = vpop.f32.mrf.mxu0
        %v394 = vadd.f32 0.0, %v393
        %395 = vmatmul.bf16.gmra.mxu0 %v350
        %v396 = vpop.f32.mrf.mxu0
        %v397 = vadd.f32 0.0, %v396
        %v398 = vpop.f32.mrf.mxu0
        %v399 = vadd.f32 0.0, %v398
        %400 = vdwg.mxu0
        %401 = vmatpush.bf16.msra.mxu0 0
        %402 = vmatpush.bf16.msra.mxu0 0
        %403 = vmatpush.bf16.msra.mxu0 0
        %404 = vmatpush.bf16.msra.mxu0 0
        %405 = vmatpush.bf16.msra.mxu0 0
        %406 = vmatpush.bf16.msra.mxu0 0
        %407 = vmatpush.bf16.msra.mxu0 0
        %408 = vmatpush.bf16.msra.mxu0 %v291
        %409 = vmatmul.bf16.gmra.mxu0 %v329
        %v410 = vpop.f32.mrf.mxu0
        %v411 = vadd.f32 0.0, %v410
        %v412 = vpop.f32.mrf.mxu0
        %v413 = vadd.f32 0.0, %v412
        %414 = vmatmul.bf16.gmra.mxu0 %v332
        %v415 = vpop.f32.mrf.mxu0
        %v416 = vadd.f32 0.0, %v415
        %v417 = vpop.f32.mrf.mxu0
        %v418 = vadd.f32 0.0, %v417
        %419 = vmatmul.bf16.gmra.mxu0 %v335
        %v420 = vpop.f32.mrf.mxu0
        %v421 = vadd.f32 0.0, %v420
        %v422 = vpop.f32.mrf.mxu0
        %v423 = vadd.f32 0.0, %v422
        %424 = vmatmul.bf16.gmra.mxu0 %v338
        %v425 = vpop.f32.mrf.mxu0
        %v426 = vadd.f32 0.0, %v425
        %v427 = vpop.f32.mrf.mxu0
        %v428 = vadd.f32 0.0, %v427
        %429 = vmatmul.bf16.gmra.mxu0 %v341
        %v430 = vpop.f32.mrf.mxu0
        %v431 = vadd.f32 0.0, %v430
        %v432 = vpop.f32.mrf.mxu0
        %v433 = vadd.f32 0.0, %v432
        %434 = vmatmul.bf16.gmra.mxu0 %v344
        %v435 = vpop.f32.mrf.mxu0
        %v436 = vadd.f32 0.0, %v435
        %v437 = vpop.f32.mrf.mxu0
        %v438 = vadd.f32 0.0, %v437
        %439 = vmatmul.bf16.gmra.mxu0 %v347
        %v440 = vpop.f32.mrf.mxu0
        %v441 = vadd.f32 0.0, %v440
        %v442 = vpop.f32.mrf.mxu0
        %v443 = vadd.f32 0.0, %v442
        %444 = vmatmul.bf16.gmra.mxu0 %v350
        %v445 = vpop.f32.mrf.mxu0
        %v446 = vadd.f32 0.0, %v445
        %v447 = vpop.f32.mrf.mxu0
        %v448 = vadd.f32 0.0, %v447
        %449 = vdwg.mxu0
        %450 = vmatpush.bf16.msra.mxu0 0
        %451 = vmatpush.bf16.msra.mxu0 0
        %452 = vmatpush.bf16.msra.mxu0 0
        %453 = vmatpush.bf16.msra.mxu0 0
        %454 = vmatpush.bf16.msra.mxu0 0
        %455 = vmatpush.bf16.msra.mxu0 0
        %456 = vmatpush.bf16.msra.mxu0 0
        %457 = vmatpush.bf16.msra.mxu0 %v297
        %458 = vmatmul.bf16.gmra.mxu0 %v329
        %v459 = vpop.f32.mrf.mxu0
        %v460 = vadd.f32 0.0, %v459
        %v461 = vpop.f32.mrf.mxu0
        %v462 = vadd.f32 0.0, %v461
        %463 = vmatmul.bf16.gmra.mxu0 %v332
        %v464 = vpop.f32.mrf.mxu0
        %v465 = vadd.f32 0.0, %v464
        %v466 = vpop.f32.mrf.mxu0
        %v467 = vadd.f32 0.0, %v466
        %468 = vmatmul.bf16.gmra.mxu0 %v335
        %v469 = vpop.f32.mrf.mxu0
        %v470 = vadd.f32 0.0, %v469
        %v471 = vpop.f32.mrf.mxu0
        %v472 = vadd.f32 0.0, %v471
        %473 = vmatmul.bf16.gmra.mxu0 %v338
        %v474 = vpop.f32.mrf.mxu0
        %v475 = vadd.f32 0.0, %v474
        %v476 = vpop.f32.mrf.mxu0
        %v477 = vadd.f32 0.0, %v476
        %478 = vmatmul.bf16.gmra.mxu0 %v341
        %v479 = vpop.f32.mrf.mxu0
        %v480 = vadd.f32 0.0, %v479
        %v481 = vpop.f32.mrf.mxu0
        %v482 = vadd.f32 0.0, %v481
        %483 = vmatmul.bf16.gmra.mxu0 %v344
        %v484 = vpop.f32.mrf.mxu0
        %v485 = vadd.f32 0.0, %v484
        %v486 = vpop.f32.mrf.mxu0
        %v487 = vadd.f32 0.0, %v486
        %488 = vmatmul.bf16.gmra.mxu0 %v347
        %v489 = vpop.f32.mrf.mxu0
        %v490 = vadd.f32 0.0, %v489
        %v491 = vpop.f32.mrf.mxu0
        %v492 = vadd.f32 0.0, %v491
        %493 = vmatmul.bf16.gmra.mxu0 %v350
        %v494 = vpop.f32.mrf.mxu0
        %v495 = vadd.f32 0.0, %v494
        %v496 = vpop.f32.mrf.mxu0
        %v497 = vadd.f32 0.0, %v496
        %498 = vdwg.mxu0
        %499 = vmatpush.bf16.msra.mxu0 0
        %500 = vmatpush.bf16.msra.mxu0 0
        %501 = vmatpush.bf16.msra.mxu0 0
        %502 = vmatpush.bf16.msra.mxu0 0
        %503 = vmatpush.bf16.msra.mxu0 0
        %504 = vmatpush.bf16.msra.mxu0 0
        %505 = vmatpush.bf16.msra.mxu0 0
        %506 = vmatpush.bf16.msra.mxu0 %v303
        %507 = vmatmul.bf16.gmra.mxu0 %v329
        %v508 = vpop.f32.mrf.mxu0
        %v509 = vadd.f32 0.0, %v508
        %v510 = vpop.f32.mrf.mxu0
        %v511 = vadd.f32 0.0, %v510
        %512 = vmatmul.bf16.gmra.mxu0 %v332
        %v513 = vpop.f32.mrf.mxu0
        %v514 = vadd.f32 0.0, %v513
        %v515 = vpop.f32.mrf.mxu0
        %v516 = vadd.f32 0.0, %v515
        %517 = vmatmul.bf16.gmra.mxu0 %v335
        %v518 = vpop.f32.mrf.mxu0
        %v519 = vadd.f32 0.0, %v518
        %v520 = vpop.f32.mrf.mxu0
        %v521 = vadd.f32 0.0, %v520
        %522 = vmatmul.bf16.gmra.mxu0 %v338
        %v523 = vpop.f32.mrf.mxu0
        %v524 = vadd.f32 0.0, %v523
        %v525 = vpop.f32.mrf.mxu0
        %v526 = vadd.f32 0.0, %v525
        %527 = vmatmul.bf16.gmra.mxu0 %v341
        %v528 = vpop.f32.mrf.mxu0
        %v529 = vadd.f32 0.0, %v528
        %v530 = vpop.f32.mrf.mxu0
        %v531 = vadd.f32 0.0, %v530
        %532 = vmatmul.bf16.gmra.mxu0 %v344
        %v533 = vpop.f32.mrf.mxu0
        %v534 = vadd.f32 0.0, %v533
        %v535 = vpop.f32.mrf.mxu0
        %v536 = vadd.f32 0.0, %v535
        %537 = vmatmul.bf16.gmra.mxu0 %v347
        %v538 = vpop.f32.mrf.mxu0
        %v539 = vadd.f32 0.0, %v538
        %v540 = vpop.f32.mrf.mxu0
        %v541 = vadd.f32 0.0, %v540
        %542 = vmatmul.bf16.gmra.mxu0 %v350
        %v543 = vpop.f32.mrf.mxu0
        %v544 = vadd.f32 0.0, %v543
        %v545 = vpop.f32.mrf.mxu0
        %v546 = vadd.f32 0.0, %v545
        %547 = vdwg.mxu0
        %p548 = scmp.eq.s32.totalorder %s24, 0
        // Predicated region
        $region33: #{tpu_custom_call.1} parent=27 // pred_check
          %p549 = pneg %p548
        $region34: #{tpu_custom_call.1} parent=27 // pred_check_branch
          %551 = sbr.rel (%p549) target = $region36
        $region35: #{tpu_custom_call.1} parent=27 // pred_region
          %552 = vst [vmem:[%s199] sm:$0xff] %v362
          %553 = vst [vmem:[%s199 + $0x8] sm:$0xff] %v411
          %554 = vst [vmem:[%s199 + $0x10] sm:$0xff] %v460
          %555 = vst [vmem:[%s199 + $0x18] sm:$0xff] %v509
          %556 = vst [vmem:[%s199 + $0x20] sm:$0xff] %v364
          %557 = vst [vmem:[%s199 + $0x28] sm:$0xff] %v413
          %558 = vst [vmem:[%s199 + $0x30] sm:$0xff] %v462
          %559 = vst [vmem:[%s199 + $0x38] sm:$0xff] %v511
          %560 = vst [vmem:[%s199 + $0x40] sm:$0xff] %v367
          %561 = vst [vmem:[%s199 + $0x48] sm:$0xff] %v416
          %562 = vst [vmem:[%s199 + $0x50] sm:$0xff] %v465
          %563 = vst [vmem:[%s199 + $0x58] sm:$0xff] %v514
          %564 = vst [vmem:[%s199 + $0x60] sm:$0xff] %v369
          %565 = vst [vmem:[%s199 + $0x68] sm:$0xff] %v418
          %566 = vst [vmem:[%s199 + $0x70] sm:$0xff] %v467
          %567 = vst [vmem:[%s199 + $0x78] sm:$0xff] %v516
          %568 = vst [vmem:[%s199 + $0x80] sm:$0xff] %v372
          %569 = vst [vmem:[%s199 + $0x88] sm:$0xff] %v421
          %570 = vst [vmem:[%s199 + $0x90] sm:$0xff] %v470
          %571 = vst [vmem:[%s199 + $0x98] sm:$0xff] %v519
          %572 = vst [vmem:[%s199 + $0xa0] sm:$0xff] %v374
          %573 = vst [vmem:[%s199 + $0xa8] sm:$0xff] %v423
          %574 = vst [vmem:[%s199 + $0xb0] sm:$0xff] %v472
          %575 = vst [vmem:[%s199 + $0xb8] sm:$0xff] %v521
          %576 = vst [vmem:[%s199 + $0xc0] sm:$0xff] %v377
          %577 = vst [vmem:[%s199 + $0xc8] sm:$0xff] %v426
          %578 = vst [vmem:[%s199 + $0xd0] sm:$0xff] %v475
          %579 = vst [vmem:[%s199 + $0xd8] sm:$0xff] %v524
          %580 = vst [vmem:[%s199 + $0xe0] sm:$0xff] %v379
          %581 = vst [vmem:[%s199 + $0xe8] sm:$0xff] %v428
          %582 = vst [vmem:[%s199 + $0xf0] sm:$0xff] %v477
          %583 = vst [vmem:[%s199 + $0xf8] sm:$0xff] %v526
          %584 = vst [vmem:[%s199 + $0x100] sm:$0xff] %v382
          %585 = vst [vmem:[%s199 + $0x108] sm:$0xff] %v431
          %586 = vst [vmem:[%s199 + $0x110] sm:$0xff] %v480
          %587 = vst [vmem:[%s199 + $0x118] sm:$0xff] %v529
          %588 = vst [vmem:[%s199 + $0x120] sm:$0xff] %v384
          %589 = vst [vmem:[%s199 + $0x128] sm:$0xff] %v433
          %590 = vst [vmem:[%s199 + $0x130] sm:$0xff] %v482
          %591 = vst [vmem:[%s199 + $0x138] sm:$0xff] %v531
          %592 = vst [vmem:[%s199 + $0x140] sm:$0xff] %v387
          %593 = vst [vmem:[%s199 + $0x148] sm:$0xff] %v436
          %594 = vst [vmem:[%s199 + $0x150] sm:$0xff] %v485
          %595 = vst [vmem:[%s199 + $0x158] sm:$0xff] %v534
          %596 = vst [vmem:[%s199 + $0x160] sm:$0xff] %v389
          %597 = vst [vmem:[%s199 + $0x168] sm:$0xff] %v438
          %598 = vst [vmem:[%s199 + $0x170] sm:$0xff] %v487
          %599 = vst [vmem:[%s199 + $0x178] sm:$0xff] %v536
          %600 = vst [vmem:[%s199 + $0x180] sm:$0xff] %v392
          %601 = vst [vmem:[%s199 + $0x188] sm:$0xff] %v441
          %602 = vst [vmem:[%s199 + $0x190] sm:$0xff] %v490
          %603 = vst [vmem:[%s199 + $0x198] sm:$0xff] %v539
          %604 = vst [vmem:[%s199 + $0x1a0] sm:$0xff] %v394
          %605 = vst [vmem:[%s199 + $0x1a8] sm:$0xff] %v443
          %606 = vst [vmem:[%s199 + $0x1b0] sm:$0xff] %v492
          %607 = vst [vmem:[%s199 + $0x1b8] sm:$0xff] %v541
          %608 = vst [vmem:[%s199 + $0x1c0] sm:$0xff] %v397
          %609 = vst [vmem:[%s199 + $0x1c8] sm:$0xff] %v446
          %610 = vst [vmem:[%s199 + $0x1d0] sm:$0xff] %v495
          %611 = vst [vmem:[%s199 + $0x1d8] sm:$0xff] %v544
          %612 = vst [vmem:[%s199 + $0x1e0] sm:$0xff] %v399
          %613 = vst [vmem:[%s199 + $0x1e8] sm:$0xff] %v448
          %614 = vst [vmem:[%s199 + $0x1f0] sm:$0xff] %v497
          %615 = vst [vmem:[%s199 + $0x1f8] sm:$0xff] %v546
        $region36: #{tpu_custom_call.1} parent=27 // pred_fallthru
          _
        %p616 = scmp.gt.s32.totalorder %s24, 0
        // Predicated region
        $region37: #{tpu_custom_call.1} parent=27 // pred_check
          %p617 = pneg %p616
        $region38: #{tpu_custom_call.1} parent=27 // pred_check_branch
          %619 = sbr.rel (%p617) target = $region40
        $region39: #{tpu_custom_call.1} parent=27 // pred_region
          %v620 = vld [vmem:[%s199] sm:$0xff]
          %v621 = vld [vmem:[%s199 + $0x8] sm:$0xff]
          %v622 = vld [vmem:[%s199 + $0x10] sm:$0xff]
          %v623 = vld [vmem:[%s199 + $0x18] sm:$0xff]
          %v624 = vld [vmem:[%s199 + $0x20] sm:$0xff]
          %v625 = vld [vmem:[%s199 + $0x28] sm:$0xff]
          %v626 = vld [vmem:[%s199 + $0x30] sm:$0xff]
          %v627 = vld [vmem:[%s199 + $0x38] sm:$0xff]
          %v628 = vld [vmem:[%s199 + $0x40] sm:$0xff]
          %v629 = vld [vmem:[%s199 + $0x48] sm:$0xff]
          %v630 = vld [vmem:[%s199 + $0x50] sm:$0xff]
          %v631 = vld [vmem:[%s199 + $0x58] sm:$0xff]
          %v632 = vld [vmem:[%s199 + $0x60] sm:$0xff]
          %v633 = vld [vmem:[%s199 + $0x68] sm:$0xff]
          %v634 = vld [vmem:[%s199 + $0x70] sm:$0xff]
          %v635 = vld [vmem:[%s199 + $0x78] sm:$0xff]
          %v636 = vld [vmem:[%s199 + $0x80] sm:$0xff]
          %v637 = vld [vmem:[%s199 + $0x88] sm:$0xff]
          %v638 = vld [vmem:[%s199 + $0x90] sm:$0xff]
          %v639 = vld [vmem:[%s199 + $0x98] sm:$0xff]
          %v640 = vld [vmem:[%s199 + $0xa0] sm:$0xff]
          %v641 = vld [vmem:[%s199 + $0xa8] sm:$0xff]
          %v642 = vld [vmem:[%s199 + $0xb0] sm:$0xff]
          %v643 = vld [vmem:[%s199 + $0xb8] sm:$0xff]
          %v644 = vld [vmem:[%s199 + $0xc0] sm:$0xff]
          %v645 = vld [vmem:[%s199 + $0xc8] sm:$0xff]
          %v646 = vld [vmem:[%s199 + $0xd0] sm:$0xff]
          %v647 = vld [vmem:[%s199 + $0xd8] sm:$0xff]
          %v648 = vld [vmem:[%s199 + $0xe0] sm:$0xff]
          %v649 = vld [vmem:[%s199 + $0xe8] sm:$0xff]
          %v650 = vld [vmem:[%s199 + $0xf0] sm:$0xff]
          %v651 = vld [vmem:[%s199 + $0xf8] sm:$0xff]
          %v652 = vld [vmem:[%s199 + $0x100] sm:$0xff]
          %v653 = vld [vmem:[%s199 + $0x108] sm:$0xff]
          %v654 = vld [vmem:[%s199 + $0x110] sm:$0xff]
          %v655 = vld [vmem:[%s199 + $0x118] sm:$0xff]
          %v656 = vld [vmem:[%s199 + $0x120] sm:$0xff]
          %v657 = vld [vmem:[%s199 + $0x128] sm:$0xff]
          %v658 = vld [vmem:[%s199 + $0x130] sm:$0xff]
          %v659 = vld [vmem:[%s199 + $0x138] sm:$0xff]
          %v660 = vld [vmem:[%s199 + $0x140] sm:$0xff]
          %v661 = vld [vmem:[%s199 + $0x148] sm:$0xff]
          %v662 = vld [vmem:[%s199 + $0x150] sm:$0xff]
          %v663 = vld [vmem:[%s199 + $0x158] sm:$0xff]
          %v664 = vld [vmem:[%s199 + $0x160] sm:$0xff]
          %v665 = vld [vmem:[%s199 + $0x168] sm:$0xff]
          %v666 = vld [vmem:[%s199 + $0x170] sm:$0xff]
          %v667 = vld [vmem:[%s199 + $0x178] sm:$0xff]
          %v668 = vld [vmem:[%s199 + $0x180] sm:$0xff]
          %v669 = vld [vmem:[%s199 + $0x188] sm:$0xff]
          %v670 = vld [vmem:[%s199 + $0x190] sm:$0xff]
          %v671 = vld [vmem:[%s199 + $0x198] sm:$0xff]
          %v672 = vld [vmem:[%s199 + $0x1a0] sm:$0xff]
          %v673 = vld [vmem:[%s199 + $0x1a8] sm:$0xff]
          %v674 = vld [vmem:[%s199 + $0x1b0] sm:$0xff]
          %v675 = vld [vmem:[%s199 + $0x1b8] sm:$0xff]
          %v676 = vld [vmem:[%s199 + $0x1c0] sm:$0xff]
          %v677 = vld [vmem:[%s199 + $0x1c8] sm:$0xff]
          %v678 = vld [vmem:[%s199 + $0x1d0] sm:$0xff]
          %v679 = vld [vmem:[%s199 + $0x1d8] sm:$0xff]
          %v680 = vld [vmem:[%s199 + $0x1e0] sm:$0xff]
          %v681 = vld [vmem:[%s199 + $0x1e8] sm:$0xff]
          %v682 = vld [vmem:[%s199 + $0x1f0] sm:$0xff]
          %v683 = vld [vmem:[%s199 + $0x1f8] sm:$0xff]
          %v684 = vadd.f32 %v620, %v362
          %v685 = vadd.f32 %v621, %v411
          %v686 = vadd.f32 %v622, %v460
          %v687 = vadd.f32 %v623, %v509
          %v688 = vadd.f32 %v624, %v364
          %v689 = vadd.f32 %v625, %v413
          %v690 = vadd.f32 %v626, %v462
          %v691 = vadd.f32 %v627, %v511
          %v692 = vadd.f32 %v628, %v367
          %v693 = vadd.f32 %v629, %v416
          %v694 = vadd.f32 %v630, %v465
          %v695 = vadd.f32 %v631, %v514
          %v696 = vadd.f32 %v632, %v369
          %v697 = vadd.f32 %v633, %v418
          %v698 = vadd.f32 %v634, %v467
          %v699 = vadd.f32 %v635, %v516
          %v700 = vadd.f32 %v636, %v372
          %v701 = vadd.f32 %v637, %v421
          %v702 = vadd.f32 %v638, %v470
          %v703 = vadd.f32 %v639, %v519
          %v704 = vadd.f32 %v640, %v374
          %v705 = vadd.f32 %v641, %v423
          %v706 = vadd.f32 %v642, %v472
          %v707 = vadd.f32 %v643, %v521
          %v708 = vadd.f32 %v644, %v377
          %v709 = vadd.f32 %v645, %v426
          %v710 = vadd.f32 %v646, %v475
          %v711 = vadd.f32 %v647, %v524
          %v712 = vadd.f32 %v648, %v379
          %v713 = vadd.f32 %v649, %v428
          %v714 = vadd.f32 %v650, %v477
          %v715 = vadd.f32 %v651, %v526
          %v716 = vadd.f32 %v652, %v382
          %v717 = vadd.f32 %v653, %v431
          %v718 = vadd.f32 %v654, %v480
          %v719 = vadd.f32 %v655, %v529
          %v720 = vadd.f32 %v656, %v384
          %v721 = vadd.f32 %v657, %v433
          %v722 = vadd.f32 %v658, %v482
          %v723 = vadd.f32 %v659, %v531
          %v724 = vadd.f32 %v660, %v387
          %v725 = vadd.f32 %v661, %v436
          %v726 = vadd.f32 %v662, %v485
          %v727 = vadd.f32 %v663, %v534
          %v728 = vadd.f32 %v664, %v389
          %v729 = vadd.f32 %v665, %v438
          %v730 = vadd.f32 %v666, %v487
          %v731 = vadd.f32 %v667, %v536
          %v732 = vadd.f32 %v668, %v392
          %v733 = vadd.f32 %v669, %v441
          %v734 = vadd.f32 %v670, %v490
          %v735 = vadd.f32 %v671, %v539
          %v736 = vadd.f32 %v672, %v394
          %v737 = vadd.f32 %v673, %v443
          %v738 = vadd.f32 %v674, %v492
          %v739 = vadd.f32 %v675, %v541
          %v740 = vadd.f32 %v676, %v397
          %v741 = vadd.f32 %v677, %v446
          %v742 = vadd.f32 %v678, %v495
          %v743 = vadd.f32 %v679, %v544
          %v744 = vadd.f32 %v680, %v399
          %v745 = vadd.f32 %v681, %v448
          %v746 = vadd.f32 %v682, %v497
          %v747 = vadd.f32 %v683, %v546
          %748 = vst [vmem:[%s199] sm:$0xff] %v684
          %749 = vst [vmem:[%s199 + $0x8] sm:$0xff] %v685
          %750 = vst [vmem:[%s199 + $0x10] sm:$0xff] %v686
          %751 = vst [vmem:[%s199 + $0x18] sm:$0xff] %v687
          %752 = vst [vmem:[%s199 + $0x20] sm:$0xff] %v688
          %753 = vst [vmem:[%s199 + $0x28] sm:$0xff] %v689
          %754 = vst [vmem:[%s199 + $0x30] sm:$0xff] %v690
          %755 = vst [vmem:[%s199 + $0x38] sm:$0xff] %v691
          %756 = vst [vmem:[%s199 + $0x40] sm:$0xff] %v692
          %757 = vst [vmem:[%s199 + $0x48] sm:$0xff] %v693
          %758 = vst [vmem:[%s199 + $0x50] sm:$0xff] %v694
          %759 = vst [vmem:[%s199 + $0x58] sm:$0xff] %v695
          %760 = vst [vmem:[%s199 + $0x60] sm:$0xff] %v696
          %761 = vst [vmem:[%s199 + $0x68] sm:$0xff] %v697
          %762 = vst [vmem:[%s199 + $0x70] sm:$0xff] %v698
          %763 = vst [vmem:[%s199 + $0x78] sm:$0xff] %v699
          %764 = vst [vmem:[%s199 + $0x80] sm:$0xff] %v700
          %765 = vst [vmem:[%s199 + $0x88] sm:$0xff] %v701
          %766 = vst [vmem:[%s199 + $0x90] sm:$0xff] %v702
          %767 = vst [vmem:[%s199 + $0x98] sm:$0xff] %v703
          %768 = vst [vmem:[%s199 + $0xa0] sm:$0xff] %v704
          %769 = vst [vmem:[%s199 + $0xa8] sm:$0xff] %v705
          %770 = vst [vmem:[%s199 + $0xb0] sm:$0xff] %v706
          %771 = vst [vmem:[%s199 + $0xb8] sm:$0xff] %v707
          %772 = vst [vmem:[%s199 + $0xc0] sm:$0xff] %v708
          %773 = vst [vmem:[%s199 + $0xc8] sm:$0xff] %v709
          %774 = vst [vmem:[%s199 + $0xd0] sm:$0xff] %v710
          %775 = vst [vmem:[%s199 + $0xd8] sm:$0xff] %v711
          %776 = vst [vmem:[%s199 + $0xe0] sm:$0xff] %v712
          %777 = vst [vmem:[%s199 + $0xe8] sm:$0xff] %v713
          %778 = vst [vmem:[%s199 + $0xf0] sm:$0xff] %v714
          %779 = vst [vmem:[%s199 + $0xf8] sm:$0xff] %v715
          %780 = vst [vmem:[%s199 + $0x100] sm:$0xff] %v716
          %781 = vst [vmem:[%s199 + $0x108] sm:$0xff] %v717
          %782 = vst [vmem:[%s199 + $0x110] sm:$0xff] %v718
          %783 = vst [vmem:[%s199 + $0x118] sm:$0xff] %v719
          %784 = vst [vmem:[%s199 + $0x120] sm:$0xff] %v720
          %785 = vst [vmem:[%s199 + $0x128] sm:$0xff] %v721
          %786 = vst [vmem:[%s199 + $0x130] sm:$0xff] %v722
          %787 = vst [vmem:[%s199 + $0x138] sm:$0xff] %v723
          %788 = vst [vmem:[%s199 + $0x140] sm:$0xff] %v724
          %789 = vst [vmem:[%s199 + $0x148] sm:$0xff] %v725
          %790 = vst [vmem:[%s199 + $0x150] sm:$0xff] %v726
          %791 = vst [vmem:[%s199 + $0x158] sm:$0xff] %v727
          %792 = vst [vmem:[%s199 + $0x160] sm:$0xff] %v728
          %793 = vst [vmem:[%s199 + $0x168] sm:$0xff] %v729
          %794 = vst [vmem:[%s199 + $0x170] sm:$0xff] %v730
          %795 = vst [vmem:[%s199 + $0x178] sm:$0xff] %v731
          %796 = vst [vmem:[%s199 + $0x180] sm:$0xff] %v732
          %797 = vst [vmem:[%s199 + $0x188] sm:$0xff] %v733
          %798 = vst [vmem:[%s199 + $0x190] sm:$0xff] %v734
          %799 = vst [vmem:[%s199 + $0x198] sm:$0xff] %v735
          %800 = vst [vmem:[%s199 + $0x1a0] sm:$0xff] %v736
          %801 = vst [vmem:[%s199 + $0x1a8] sm:$0xff] %v737
          %802 = vst [vmem:[%s199 + $0x1b0] sm:$0xff] %v738
          %803 = vst [vmem:[%s199 + $0x1b8] sm:$0xff] %v739
          %804 = vst [vmem:[%s199 + $0x1c0] sm:$0xff] %v740
          %805 = vst [vmem:[%s199 + $0x1c8] sm:$0xff] %v741
          %806 = vst [vmem:[%s199 + $0x1d0] sm:$0xff] %v742
          %807 = vst [vmem:[%s199 + $0x1d8] sm:$0xff] %v743
          %808 = vst [vmem:[%s199 + $0x1e0] sm:$0xff] %v744
          %809 = vst [vmem:[%s199 + $0x1e8] sm:$0xff] %v745
          %810 = vst [vmem:[%s199 + $0x1f0] sm:$0xff] %v746
          %811 = vst [vmem:[%s199 + $0x1f8] sm:$0xff] %v747
        $region40: #{tpu_custom_call.1} parent=27 // pred_fallthru
          _
        %s812 = sand.u32 %s95, 1
        %s813 = scalar_lea.sflag [#allocation4], %s812
        %s814 = sand.u32 %s95, 1
        %s815 = smul.addr %s814, 512
        %s816 = scalar_lea.vmem [#allocation5], %s815
        // Predicated region
        $region41: #{tpu_custom_call.1} parent=27 // pred_check
          %p817 = pneg %p105
        $region42: #{tpu_custom_call.1} parent=27 // pred_check_branch
          %819 = sbr.rel (%p817) target = $region44
        $region43: #{tpu_custom_call.1} parent=27 // pred_region
          %821 = vsyncadd %s813, 0
          %s822 = smul.addr %s23, 64
          %s823 = smul.addr %s822, 8
          %s824 = scalar_lea.hbm %s2, %s823
          %s825 = sshll.u32 %s816, 4
          %s826 = int_to_ptr.vmem [resolvable:$true] %s825
          %s827 = sshll.u32 %s824, 4
          %s828 = int_to_ptr.hbm [resolvable:$true] %s827
          %833 = dma.vmem_to_hbm [thread:$0]  %s826, 8192, %s828, %s813, 512, 512, 32
        $region44: #{tpu_custom_call.1} parent=27 // pred_fallthru
          _
      $region28: #{tpu_custom_call.1} parent=5 // pred_fallthru
        _
      %p834 = scmp.le.s32.totalorder 2, %s14
      // Predicated region
      $region45: #{tpu_custom_call.1} parent=5 // pred_check
        %p835 = pneg %p834
      $region46: #{tpu_custom_call.1} parent=5 // pred_check_branch
        %837 = sbr.rel (%p835) target = $region48
      $region47: #{tpu_custom_call.1} parent=5 // pred_region
        %s838 = ssub.s32 %s14, 2
        // Predicated region
        $region49: #{tpu_custom_call.1} parent=47 // pred_check
          %p839 = pneg %p111
        $region50: #{tpu_custom_call.1} parent=47 // pred_check_branch
          %841 = sbr.rel (%p839) target = $region52
        $region51: #{tpu_custom_call.1} parent=47 // pred_region
          %s842 = sand.u32 %s96, 1
          %s843 = scalar_lea.sflag [#allocation4], %s842
          %s844 = sand.u32 %s96, 1
          %s845 = smul.addr %s844, 512
          %s846 = scalar_lea.vmem [#allocation5], %s845
          %848 = dma.done %s843, 8192
        $region52: #{tpu_custom_call.1} parent=47 // pred_fallthru
          _
      $region48: #{tpu_custom_call.1} parent=5 // pred_fallthru
        _
    $region6: #{tpu_custom_call.1} parent=1 // loop_footer
      %s18 = sadd.s32 1, %s14
    $region7: #{tpu_custom_call.1} parent=1 // loop_footer_branch
      %13 = sbr.rel target = $region3
    $region8: #{tpu_custom_call.1} parent=1 // loop_exit
      _
    %849 = vsyncpa [#allocation3], 1
    %s850 = scalar_lea.sflag [#allocation3], 1
    %851 = vsyncpa %s850, 1
    %852 = vsyncpa [#allocation4], 1
    %s853 = scalar_lea.sflag [#allocation4], 1
    %854 = vsyncpa %s853, 1

</llo_original>
